<compile_context>
chip_gen: v7x
topology: tpu7x:2x2x1
jax: 0.10.0
libtpu: 0.0.40
codegen_flags: <defaults>
</compile_context>

<pallas_src>
import math

import jax
import jax.numpy as jnp
from jax import lax
from jax.experimental import pallas as pl
from jax.experimental.pallas import tpu as pltpu


# ----------------------------------------------------------------------------
# Generation-aware VMEM limit, compiler params, tile-size selection
# ----------------------------------------------------------------------------
_VMEM_LIMIT_CACHE = None


def _vmem_limit_bytes():
    """~75% of physical VMEM (96 MiB on v5e/v6e, 48 MiB on v7x)."""
    global _VMEM_LIMIT_CACHE
    if _VMEM_LIMIT_CACHE is None:
        try:
            cap = int(pltpu.get_tpu_info().vmem_capacity_bytes)
        except Exception:
            cap = 64 * 1024 * 1024          # conservative (v7x-sized) fallback
        _VMEM_LIMIT_CACHE = max(32 * 1024 * 1024,
                                min((cap * 3) // 4, 100 * 1024 * 1024))
    return _VMEM_LIMIT_CACHE


def _compiler_params(n_parallel, vmem_limit):
    return pltpu.CompilerParams(
        dimension_semantics=("parallel",) * n_parallel,
        vmem_limit_bytes=int(vmem_limit),
    )


_SINGLE_BUFFER_WEIGHTS = hasattr(pl, "Buffered")


def _const_spec(shape):
    """BlockSpec for a grid-invariant input; single-buffered to save VMEM."""
    nd = len(shape)
    idx = lambda i, nd=nd: (0,) * nd
    if _SINGLE_BUFFER_WEIGHTS:
        return pl.BlockSpec(shape, idx, pipeline_mode=pl.Buffered(1))
    return pl.BlockSpec(shape, idx)


def _pick_rows(m, per_row_bytes, budget, prefer_multi_step=True):
    """Largest row tile dividing m, sublane-aligned (%8 or ==m), within budget."""
    cands = [m] + [c for c in (8, 16, 32, 64, 128, 256, 512, 1024, 2048, 4096)
                   if c < m and m % c == 0]
    aligned = [c for c in cands if c % 8 == 0 or c == m]
    valid = [c for c in aligned if c * per_row_bytes <= budget]
    if not valid:
        valid = [min(aligned)]
    multi = [c for c in valid if m // c >= 2]
    pool = multi if (prefer_multi_step and multi) else valid
    return max(pool)


def _block_vmem_bytes(bb, seq, E, Hmlp):
    """Rough VMEM footprint (bytes) of one transformer-block grid step."""
    rows = bb * seq
    weights = 2 * (3 * E * E + E * E + 2 * E * Hmlp + E * E)    # bf16, 1 buffer
    tables = 2 * seq * E * 4                                    # cos / sin f32
    io = 2 * 2 * rows * E * 2                                   # in+out bf16, 2 bufs
    slab = rows * E * 4                                         # attention slab f32
    interm = rows * 4 * (10 * E + Hmlp) + 2 * bb * seq * seq * 4
    return int(1.2 * (weights + tables + io + slab + interm))


def _pick_bb(Bt, seq, E, Hmlp, budget):
    """Sequences per transformer-block grid step, derived from the VMEM budget."""
    cands = [d for d in range(1, Bt + 1) if Bt % d == 0]
    valid = [d for d in cands if _block_vmem_bytes(d, seq, E, Hmlp) <= budget]
    if not valid:
        return 1
    multi = [d for d in valid if Bt // d >= 2]   # keep >=2 grid steps (megacore)
    return max(multi) if multi else max(valid)


# ----------------------------------------------------------------------------
# Patch-embed matmul, standalone LayerNorm, fused LayerNorm + token-mean
# ----------------------------------------------------------------------------
def _matmul_bias_kernel(x_ref, w_ref, b_ref, o_ref):
    o_ref[...] = (jnp.dot(x_ref[...], w_ref[...],
                          preferred_element_type=jnp.float32)
                  + b_ref[...]).astype(o_ref.dtype)


def matmul_bias(x, w, b, vmem_limit):
    M, K = x.shape
    Nout = w.shape[1]
    per_row = 2 * K * 2 + 2 * Nout * 2 + Nout * 4
    budget = max(vmem_limit - (K * Nout * 2 + Nout * 4) - (1 << 20), 1 << 20)
    bm = _pick_rows(M, per_row, budget)
    return pl.pallas_call(
        _matmul_bias_kernel,
        grid=(M // bm,),
        in_specs=[
            pl.BlockSpec((bm, K), lambda i: (i, 0)),
            _const_spec((K, Nout)),
            _const_spec((1, Nout)),
        ],
        out_specs=pl.BlockSpec((bm, Nout), lambda i: (i, 0)),
        out_shape=jax.ShapeDtypeStruct((M, Nout), jnp.bfloat16),
        compiler_params=_compiler_params(1, vmem_limit),
    )(x, w, b)


def _layernorm_kernel(x_ref, w_ref, b_ref, o_ref):
    x = x_ref[...].astype(jnp.float32)
    mu = jnp.mean(x, axis=-1, keepdims=True)
    var = jnp.mean((x - mu) ** 2, axis=-1, keepdims=True)
    o_ref[...] = ((x - mu) * lax.rsqrt(var + 1e-5) * w_ref[...]
                  + b_ref[...]).astype(o_ref.dtype)


def layernorm(x, w, b, vmem_limit, out_dtype=jnp.float32):
    M, E = x.shape
    per_row = 2 * E * x.dtype.itemsize + E * 4 + 2 * E * jnp.dtype(out_dtype).itemsize
    bm = _pick_rows(M, per_row, vmem_limit // 2)
    return pl.pallas_call(
        _layernorm_kernel,
        grid=(M // bm,),
        in_specs=[
            pl.BlockSpec((bm, E), lambda i: (i, 0)),
            _const_spec((1, E)),
            _const_spec((1, E)),
        ],
        out_specs=pl.BlockSpec((bm, E), lambda i: (i, 0)),
        out_shape=jax.ShapeDtypeStruct((M, E), out_dtype),
        compiler_params=_compiler_params(1, vmem_limit),
    )(x, w, b)


def _ln_mean_kernel(x_ref, w_ref, b_ref, o_ref):
    x = x_ref[...].astype(jnp.float32)                 # (bt, N, E)
    mu = jnp.mean(x, axis=-1, keepdims=True)
    var = jnp.mean((x - mu) ** 2, axis=-1, keepdims=True)
    y = (x - mu) * lax.rsqrt(var + 1e-5) * w_ref[...] + b_ref[...]
    o_ref[...] = jnp.mean(y, axis=1).astype(o_ref.dtype)   # mean over tokens


def layernorm_mean_tokens(x, w, b, vmem_limit):
    BT, N, E = x.shape
    per_row = 2 * N * E * x.dtype.itemsize + 2 * N * E * 4 + 2 * E * 2
    bt = _pick_rows(BT, per_row, vmem_limit // 2)
    return pl.pallas_call(
        _ln_mean_kernel,
        grid=(BT // bt,),
        in_specs=[
            pl.BlockSpec((bt, N, E), lambda i: (i, 0, 0)),
            _const_spec((1, E)),
            _const_spec((1, E)),
        ],
        out_specs=pl.BlockSpec((bt, E), lambda i: (i, 0)),
        out_shape=jax.ShapeDtypeStruct((BT, E), jnp.bfloat16),
        compiler_params=_compiler_params(1, vmem_limit),
    )(x, w, b)


# ----------------------------------------------------------------------------
# Transformer block kernel: pre-LN MHSA w/ RoPE + pre-LN MLP.
# One grid step processes `bb` sequences.  Residual stream is bf16 in HBM,
# upcast to f32 inside the kernel.
# ----------------------------------------------------------------------------
def make_transformer_block_kernel(num_heads, bb, seq_len, embed_dim):
    N = seq_len
    E = embed_dim
    H = num_heads
    Dh = E // H
    scale = Dh ** (-0.5)

    def kernel(x_ref, cos_ref, sin_ref, rot_ref,
               ln1w_ref, ln1b_ref, wqkv_ref, wproj_ref, bproj_ref,
               ln2w_ref, ln2b_ref, w1_ref, b1_ref, w2_ref, b2_ref,
               o_ref, attn_slab):
        x = x_ref[...].reshape(bb * N, E).astype(jnp.float32)

        def ln(z, w, b):
            mu = jnp.mean(z, axis=-1, keepdims=True)
            var = jnp.mean((z - mu) ** 2, axis=-1, keepdims=True)
            return (z - mu) * lax.rsqrt(var + 1e-5) * w + b

        cos = cos_ref[...]            # (N, E) f32, head-tiled RoPE table
        sin = sin_ref[...]            # (N, E) f32
        rot = rot_ref[...]            # (E, E) bf16 block-diagonal rotate-half

        # ---- attention (pre-LN) ----
        xn = ln(x, ln1w_ref[...], ln1b_ref[...])
        qkv = jnp.dot(xn.astype(jnp.bfloat16), wqkv_ref[...],
                      preferred_element_type=jnp.float32)          # (bb*N, 3E)

        q = qkv[:, :E]
        k = qkv[:, E:2 * E]
        v = qkv[:, 2 * E:]

        # RoPE hoisted out of the head loop: one E-wide matmul per slab
        # (block-diagonal rotate-half) + one fused cos/sin multiply.
        q_rot = jnp.dot(q.astype(jnp.bfloat16), rot,
                        preferred_element_type=jnp.float32)
        k_rot = jnp.dot(k.astype(jnp.bfloat16), rot,
                        preferred_element_type=jnp.float32)
        q_emb = (q.reshape(bb, N, E) * cos
                 + q_rot.reshape(bb, N, E) * sin).astype(jnp.bfloat16)
        k_emb = (k.reshape(bb, N, E) * cos
                 + k_rot.reshape(bb, N, E) * sin).astype(jnp.bfloat16)
        v_b = v.reshape(bb, N, E).astype(jnp.bfloat16)

        # Per-head attention; each head's output is stored into a VMEM slab
        # (bounds live ranges), then one E-wide output projection on the MXU.
        # TODO(synk): for Dh < 128 the per-head lane slices are not 128-aligned;
        # a head-grouped (128/Dh heads per step) layout would remove relayouts.
        for h in range(H):
            lo, hi = h * Dh, (h + 1) * Dh
            s = jnp.einsum("bqd,bkd->bqk", q_emb[:, :, lo:hi], k_emb[:, :, lo:hi],
                           preferred_element_type=jnp.float32) * scale
            m = jnp.max(s, axis=-1, keepdims=True)
            p = jnp.exp(s - m)
            p = p * pl.reciprocal(jnp.sum(p, axis=-1, keepdims=True), approx=True)
            attn_slab[:, :, lo:hi] = jnp.einsum(
                "bqk,bkd->bqd", p.astype(jnp.bfloat16), v_b[:, :, lo:hi],
                preferred_element_type=jnp.float32)

        attn = attn_slab[...].reshape(bb * N, E).astype(jnp.bfloat16)
        proj = jnp.dot(attn, wproj_ref[...],
                       preferred_element_type=jnp.float32) + bproj_ref[...]
        x = x + proj

        # ---- MLP (pre-LN) ----
        xn2 = ln(x, ln2w_ref[...], ln2b_ref[...])
        h1 = jnp.dot(xn2.astype(jnp.bfloat16), w1_ref[...],
                     preferred_element_type=jnp.float32) + b1_ref[...]
        h1 = 0.5 * h1 * (1.0 + lax.erf(h1 * (1.0 / math.sqrt(2.0))))  # exact GELU
        y = jnp.dot(h1.astype(jnp.bfloat16), w2_ref[...],
                    preferred_element_type=jnp.float32) + b2_ref[...]

        o_ref[...] = (x + y).reshape(bb, N, E).astype(o_ref.dtype)

    return kernel


def transformer_block(x, cos, sin, rot, p, num_heads, vmem_limit):
    """x: (Bt, N, E) bf16 -> (Bt, N, E) bf16."""
    Bt, N, E = x.shape
    Hmlp = p["w1"].shape[1]
    bb = _pick_bb(Bt, N, E, Hmlp, vmem_limit)

    in_specs = [
        pl.BlockSpec((bb, N, E), lambda i: (i, 0, 0)),   # x
        _const_spec((N, E)),                             # cos (head-tiled)
        _const_spec((N, E)),                             # sin (head-tiled)
        _const_spec((E, E)),                             # block-diag rotate-half
        _const_spec((1, E)), _const_spec((1, E)),        # ln1 w/b
        _const_spec((E, 3 * E)),                         # wqkv (bf16)
        _const_spec((E, E)),                             # wproj (bf16)
        _const_spec((1, E)),                             # proj bias
        _const_spec((1, E)), _const_spec((1, E)),        # ln2 w/b
        _const_spec((E, Hmlp)), _const_spec((1, Hmlp)),  # fc1 / b1
        _const_spec((Hmlp, E)), _const_spec((1, E)),     # fc2 / b2
    ]
    out_specs = pl.BlockSpec((bb, N, E), lambda i: (i, 0, 0))

    return pl.pallas_call(
        make_transformer_block_kernel(num_heads, bb, N, E),
        grid=(Bt // bb,),
        in_specs=in_specs,
        out_specs=out_specs,
        out_shape=jax.ShapeDtypeStruct((Bt, N, E), jnp.bfloat16),
        scratch_shapes=[pltpu.VMEM((bb, N, E), jnp.float32)],   # attention slab
        compiler_params=_compiler_params(1, vmem_limit),
    )(x, cos, sin, rot,
      p["ln1w"], p["ln1b"], p["wqkv"], p["wproj"], p["bproj"],
      p["ln2w"], p["ln2b"], p["w1"], p["b1"], p["w2"], p["b2"])


# ----------------------------------------------------------------------------
# RoPE tables + rotate-half matrices (plain JAX glue, matching RotaryEmbedding)
# ----------------------------------------------------------------------------
def rope_tables(seq_len, dim):
    inv_freq = 1.0 / (10000.0 ** (jnp.arange(0, dim, 2, dtype=jnp.float32) / dim))
    t = jnp.arange(seq_len, dtype=jnp.float32)
    freqs = jnp.einsum("i,j->ij", t, inv_freq)
    emb = jnp.concatenate([freqs, freqs], axis=-1)       # (seq, dim)
    return jnp.cos(emb), jnp.sin(emb)


def rotate_half_matrix(dim):
    """(dim, dim) signed permutation R such that z @ R == rotate_half(z)."""
    half = dim // 2
    idx = jnp.arange(half)
    r = jnp.zeros((dim, dim), jnp.float32)
    r = r.at[idx, idx + half].set(1.0)     # output[d>=half] = +z[d-half]
    r = r.at[idx + half, idx].set(-1.0)    # output[d<half]  = -z[d+half]
    return r


def rotate_half_blockdiag(E, num_heads):
    Dh = E // num_heads
    return jnp.kron(jnp.eye(num_heads, dtype=jnp.float32),
                    rotate_half_matrix(Dh)).astype(jnp.bfloat16)


# ----------------------------------------------------------------------------
# Deterministic parameter init (shapes follow the nn.Module __init__)
# ----------------------------------------------------------------------------
def _xavier(key, shape):
    bound = math.sqrt(6.0 / (shape[0] + shape[1]))
    return jax.random.uniform(key, shape, jnp.float32, -bound, bound)


def init_block_params(key, E, Hmlp, H):
    ks = jax.random.split(key, 4)
    return dict(
        ln1w=jnp.ones((1, E), jnp.float32), ln1b=jnp.zeros((1, E), jnp.float32),
        wqkv=_xavier(ks[0], (E, 3 * E)).astype(jnp.bfloat16),
        wproj=_xavier(ks[1], (E, E)).astype(jnp.bfloat16),
        bproj=jnp.zeros((1, E), jnp.float32),
        ln2w=jnp.ones((1, E), jnp.float32), ln2b=jnp.zeros((1, E), jnp.float32),
        w1=_xavier(ks[2], (E, Hmlp)).astype(jnp.bfloat16),
        b1=jnp.zeros((1, Hmlp), jnp.float32),
        w2=_xavier(ks[3], (Hmlp, E)).astype(jnp.bfloat16),
        b2=jnp.zeros((1, E), jnp.float32),
    )


def init_params(key, cfg):
    E = cfg["embed_dim"]
    H = cfg["num_heads"]
    Hmlp = int(E * cfg["mlp_ratio"])
    P = cfg["patch_h"] * cfg["patch_w"]
    keys = jax.random.split(key, 1 + cfg["num_layers"] + cfg["num_temporal_layers"])
    # Conv3d(1, E, (1, ph, pw)) -> flattened patch matmul weight (P, E)
    fan_out = E * cfg["patch_h"] * cfg["patch_w"]
    conv_w = (jax.random.normal(keys[0], (P, E), jnp.float32)
              * math.sqrt(2.0 / fan_out)).astype(jnp.bfloat16)
    conv_b = jnp.zeros((1, E), jnp.float32)
    spatial = [init_block_params(keys[1 + i], E, Hmlp, H)
               for i in range(cfg["num_layers"])]
    temporal = [init_block_params(keys[1 + cfg["num_layers"] + i], E, Hmlp, H)
                for i in range(cfg["num_temporal_layers"])]
    return dict(
        conv_w=conv_w, conv_b=conv_b,
        spatial=spatial, temporal=temporal,
        norm_w=jnp.ones((1, E), jnp.float32), norm_b=jnp.zeros((1, E), jnp.float32),
        tnorm_w=jnp.ones((1, E), jnp.float32), tnorm_b=jnp.zeros((1, E), jnp.float32),
    )


# ----------------------------------------------------------------------------
# Full VideoViT forward
# ----------------------------------------------------------------------------
def video_vit_forward(x, params, cfg):
    # x: (B, 1, T, H, W) float32  (PyTorch NCDHW)
    B, C, T, H, W = x.shape
    ph, pw = cfg["patch_h"], cfg["patch_w"]
    E = cfg["embed_dim"]
    heads = cfg["num_heads"]
    Dh = E // heads
    Hp, Wp = H // ph, W // pw
    N = Hp * Wp
    vlim = _vmem_limit_bytes()

    # --- FactorizedPatchEmbed: non-overlapping conv == patch extraction + matmul ---
    frames = x[:, 0]                                        # (B, T, H, W)
    patches = frames.reshape(B, T, Hp, ph, Wp, pw)
    patches = patches.transpose(0, 1, 2, 4, 3, 5)           # (B, T, Hp, Wp, ph, pw)
    patches = patches.reshape(B * T * N, ph * pw).astype(jnp.bfloat16)
    # TODO(synk): feed raw frames to the patch-embed kernel via an index_map over
    # (Hp, Wp) to avoid materializing this XLA-side reshape/transpose in HBM.
    tokens = matmul_bias(patches, params["conv_w"], params["conv_b"], vlim)  # bf16

    rot = rotate_half_blockdiag(E, heads)                    # (E, E) bf16

    # spatial transformer over each frame's tokens
    x_sp = tokens.reshape(B * T, N, E)
    cos_s, sin_s = rope_tables(N, Dh)
    cos_s = jnp.tile(cos_s, (1, heads))                      # (N, E)
    sin_s = jnp.tile(sin_s, (1, heads))
    for p in params["spatial"]:
        x_sp = transformer_block(x_sp, cos_s, sin_s, rot, p, heads, vlim)

    # fused self.norm + mean over spatial tokens -> (B, T, E), bf16
    x_t = layernorm_mean_tokens(
        x_sp, params["norm_w"], params["norm_b"], vlim).reshape(B, T, E)

    # temporal transformer over frames
    cos_t, sin_t = rope_tables(T, Dh)
    cos_t = jnp.tile(cos_t, (1, heads))                      # (T, E)
    sin_t = jnp.tile(sin_t, (1, heads))
    for p in params["temporal"]:
        x_t = transformer_block(x_t, cos_t, sin_t, rot, p, heads, vlim)

    # temporal_norm (final output in f32)
    out = layernorm(x_t.reshape(B * T, E),
                    params["tnorm_w"], params["tnorm_b"], vlim,
                    out_dtype=jnp.float32)
    return out.reshape(B, T, E)


# ----------------------------------------------------------------------------
if __name__ == "__main__":
    cfg = dict(
        img_h=16, img_w=16, frames=4,
        patch_h=8, patch_w=8,
        embed_dim=32, num_heads=4, mlp_ratio=4.0,
        num_layers=2, num_temporal_layers=2,
    )
    B, T = 2, cfg["frames"]

    key = jax.random.PRNGKey(0)
    k_params, k_x = jax.random.split(key)
    params = init_params(k_params, cfg)
    x = jax.random.normal(k_x, (B, 1, T, cfg["img_h"], cfg["img_w"]), jnp.float32)

    try:
        out = jax.block_until_ready(video_vit_forward(x, params, cfg))
    except Exception:
        # Fallback: if this toolchain rejects single-buffered (Buffered(1))
        # constant-input BlockSpecs, retry with default double-buffering.
        globals()["_SINGLE_BUFFER_WEIGHTS"] = False
        out = jax.block_until_ready(video_vit_forward(x, params, cfg))

    assert out.shape == (B, T, cfg["embed_dim"]), out.shape
    assert bool(jnp.all(jnp.isfinite(out)))
    print("KERNEL_OK")
</pallas_src>

<mosaic_0001>
module attributes {stable_mosaic.version = 11 : i64} {
  func.func @_matmul_bias_kernel(%arg0: i32, %arg1: memref<16x64xbf16, #tpu.memory_space<vmem>>, %arg2: memref<64x32xbf16, #tpu.memory_space<vmem>>, %arg3: memref<1x32xf32, #tpu.memory_space<vmem>>, %arg4: memref<16x32xbf16, #tpu.memory_space<vmem>>) attributes {dimension_semantics = [#tpu.dimension_semantics<parallel>], iteration_bounds = array<i64: 2>, scalar_prefetch = 0 : i64, scratch_operands = 0 : i64, tpu.core_type = #tpu.core_type<tc>, window_params = [{transform_indices = @transform_0, window_bounds = array<i64: 16, 64>}, {pipeline_mode = #tpu.pipeline_mode<synchronous>, transform_indices = @transform_1, window_bounds = array<i64: 64, 32>}, {pipeline_mode = #tpu.pipeline_mode<synchronous>, transform_indices = @transform_2, window_bounds = array<i64: 1, 32>}, {transform_indices = @transform_3, window_bounds = array<i64: 16, 32>}]} {
    %c0 = arith.constant 0 : index
    %c0_0 = arith.constant 0 : index
    %0 = vector.load %arg1[%c0, %c0_0] : memref<16x64xbf16, #tpu.memory_space<vmem>>, vector<16x64xbf16>
    %c0_1 = arith.constant 0 : index
    %c0_2 = arith.constant 0 : index
    %1 = vector.load %arg2[%c0_1, %c0_2] : memref<64x32xbf16, #tpu.memory_space<vmem>>, vector<64x32xbf16>
    %cst = arith.constant dense<0.000000e+00> : vector<16x32xf32>
    %2 = tpu.matmul %0, %1, %cst {dimension_numbers = #tpu.dot_dimension_numbers<[1], [0], [0], [1], [0, 0, 1, 1], [], []>} : vector<16x64xbf16>, vector<64x32xbf16>, vector<16x32xf32> -> vector<16x32xf32>
    %c0_3 = arith.constant 0 : index
    %c0_4 = arith.constant 0 : index
    %3 = vector.load %arg3[%c0_3, %c0_4] : memref<1x32xf32, #tpu.memory_space<vmem>>, vector<1x32xf32>
    %4 = vector.broadcast %3 : vector<1x32xf32> to vector<16x32xf32>
    %5 = arith.addf %2, %4 : vector<16x32xf32>
    %6 = arith.truncf %5 : vector<16x32xf32> to vector<16x32xbf16>
    %c0_5 = arith.constant 0 : index
    %c0_6 = arith.constant 0 : index
    %7 = vector.load %arg4[%c0_5, %c0_6] : memref<16x32xbf16, #tpu.memory_space<vmem>>, vector<16x32xbf16>
    tpu.vector_store %arg4[%c0_5, %c0_6], %6 {strides = array<i32>} : memref<16x32xbf16, #tpu.memory_space<vmem>>, vector<16x32xbf16>,
    return
  }
  func.func @transform_0(%arg0: i32) -> (i32, i32) {
    %c0_i32 = arith.constant 0 : i32
    %c0_i32_0 = arith.constant 0 : i32
    return %arg0, %c0_i32 : i32, i32
  }
  func.func @transform_1(%arg0: i32) -> (i32, i32) {
    %c0_i32 = arith.constant 0 : i32
    %c0_i32_0 = arith.constant 0 : i32
    %c0_i32_1 = arith.constant 0 : i32
    return %c0_i32, %c0_i32_0 : i32, i32
  }
  func.func @transform_2(%arg0: i32) -> (i32, i32) {
    %c0_i32 = arith.constant 0 : i32
    %c0_i32_0 = arith.constant 0 : i32
    %c0_i32_1 = arith.constant 0 : i32
    return %c0_i32, %c0_i32_0 : i32, i32
  }
  func.func @transform_3(%arg0: i32) -> (i32, i32) {
    %c0_i32 = arith.constant 0 : i32
    %c0_i32_0 = arith.constant 0 : i32
    return %arg0, %c0_i32 : i32, i32
  }
}

module attributes {stable_mosaic.version = 11 : i64} {
  func.func @_matmul_bias_kernel(%arg0: i32, %arg1: memref<16x64xbf16, #tpu.memory_space<vmem>>, %arg2: memref<64x32xbf16, #tpu.memory_space<vmem>>, %arg3: memref<1x32xf32, #tpu.memory_space<vmem>>, %arg4: memref<16x32xbf16, #tpu.memory_space<vmem>>) attributes {dimension_semantics = [#tpu.dimension_semantics<parallel>], iteration_bounds = array<i64: 2>, scalar_prefetch = 0 : i64, scratch_operands = 0 : i64, tpu.core_type = #tpu.core_type<tc>, window_params = [{transform_indices = @transform_0, window_bounds = array<i64: 16, 64>}, {pipeline_mode = #tpu.pipeline_mode<synchronous>, transform_indices = @transform_1, window_bounds = array<i64: 64, 32>}, {pipeline_mode = #tpu.pipeline_mode<synchronous>, transform_indices = @transform_2, window_bounds = array<i64: 1, 32>}, {transform_indices = @transform_3, window_bounds = array<i64: 16, 32>}]} {
    %c0 = arith.constant 0 : index
    %c0_0 = arith.constant 0 : index
    %0 = vector.load %arg1[%c0, %c0_0] : memref<16x64xbf16, #tpu.memory_space<vmem>>, vector<16x64xbf16>
    %c0_1 = arith.constant 0 : index
    %c0_2 = arith.constant 0 : index
    %1 = vector.load %arg2[%c0_1, %c0_2] : memref<64x32xbf16, #tpu.memory_space<vmem>>, vector<64x32xbf16>
    %cst = arith.constant dense<0.000000e+00> : vector<16x32xf32>
    %2 = tpu.matmul %0, %1, %cst {dimension_numbers = #tpu.dot_dimension_numbers<[1], [0], [0], [1], [0, 0, 1, 1], [], []>} : vector<16x64xbf16>, vector<64x32xbf16>, vector<16x32xf32> -> vector<16x32xf32>
    %c0_3 = arith.constant 0 : index
    %c0_4 = arith.constant 0 : index
    %3 = vector.load %arg3[%c0_3, %c0_4] : memref<1x32xf32, #tpu.memory_space<vmem>>, vector<1x32xf32>
    %4 = vector.broadcast %3 : vector<1x32xf32> to vector<16x32xf32>
    %5 = arith.addf %2, %4 : vector<16x32xf32>
    %6 = arith.truncf %5 : vector<16x32xf32> to vector<16x32xbf16>
    %c0_5 = arith.constant 0 : index
    %c0_6 = arith.constant 0 : index
    %7 = vector.load %arg4[%c0_5, %c0_6] : memref<16x32xbf16, #tpu.memory_space<vmem>>, vector<16x32xbf16>
    tpu.vector_store %arg4[%c0_5, %c0_6], %6 {strides = array<i32>} : memref<16x32xbf16, #tpu.memory_space<vmem>>, vector<16x32xbf16>,
    return
  }
  func.func @transform_0(%arg0: i32) -> (i32, i32) {
    %c0_i32 = arith.constant 0 : i32
    %c0_i32_0 = arith.constant 0 : i32
    return %arg0, %c0_i32 : i32, i32
  }
  func.func @transform_1(%arg0: i32) -> (i32, i32) {
    %c0_i32 = arith.constant 0 : i32
    %c0_i32_0 = arith.constant 0 : i32
    %c0_i32_1 = arith.constant 0 : i32
    return %c0_i32, %c0_i32_0 : i32, i32
  }
  func.func @transform_2(%arg0: i32) -> (i32, i32) {
    %c0_i32 = arith.constant 0 : i32
    %c0_i32_0 = arith.constant 0 : i32
    %c0_i32_1 = arith.constant 0 : i32
    return %c0_i32, %c0_i32_0 : i32, i32
  }
  func.func @transform_3(%arg0: i32) -> (i32, i32) {
    %c0_i32 = arith.constant 0 : i32
    %c0_i32_0 = arith.constant 0 : i32
    return %arg0, %c0_i32 : i32, i32
  }
}

</mosaic_0001>

<llo_original>
// kernel: tpu_custom_call.1
$region0: #{tpu_custom_call.1}
  #allocation0 [shape = 'u32[]', space=smem, size = 0x4, offset = 0x4, fixed_abs, tag = 'smem constant byte address 0x4 - core index']
  #allocation1 [shape = 'u32[144,128]{1,0:T(1,128)}', space=vmem, size = 0x12000, scoped, tag = 'internal scratch']
  %s0 = inlined_call_operand.vmem [shape: bf16[32,64], index: 0, kind: input, shape index: {}]
  %s1 = inlined_call_operand.vmem [shape: bf16[64,32], index: 1, kind: input, shape index: {}]
  %s2 = inlined_call_operand.vmem [shape: f32[1,32], index: 2, kind: input, shape index: {}]
  %s3 = inlined_call_operand.hbm [shape: bf16[32,32], index: 3, kind: output, shape index: {}]
  %s4 = sld [smem:[#allocation0]]
  $region45: #{tpu_custom_call.1} parent=0
    _
  %s6 = ssub.s32 1, %s4
  %s7 = scalar_select 0, %s6, %s4
  $region1: #{tpu_custom_call.1} parent=0
    #allocation2 [shape = 'u8[8192]{0}', space=vmem, size = 0x2000, scoped, tag = 'output window, operand 0']
    #allocation3 [shape = 's32[2]{0}', space=sflag, size = 0x8, scoped, tag = 'scoped memory for tpu_custom_call.1']
    %8 = vsyncpa [#allocation3], 0
    %s9 = scalar_lea.sflag [#allocation3], 1
    %10 = vsyncpa %s9, 0
    loop: start=0, step=1, limit=4
    $region2: #{tpu_custom_call.1} parent=1 // loop_pre_header
      _
    $region3: #{tpu_custom_call.1} parent=1 // loop_header
      %s12 = sphi 0, %s16
      %p13 = scmp.ge.s32.totalorder %s12, 4
      %s22 = sphi 0, %s24
      %s25 = sphi 0, %s22
      %s26 = sphi 0, %s25
      %s42 = sphi 0, %s26
      %s46 = sphi 0, %s46
      %s48 = sphi 0, %s46
      %s49 = sphi 0, %s48
      %s63 = sphi 0, %s49
      %s67 = sphi 0, %s67
      %s69 = sphi 0, %s67
      %s70 = sphi 0, %s69
      %s84 = sphi 0, %s70
      %s90 = sphi 0, %s92
      %s93 = sphi 0, %s90
      %s94 = sphi 0, %s93
      %s110 = sphi 0, %s94
    $region4: #{tpu_custom_call.1} parent=1 // loop_header_branch
      %15 = sbr.rel (%p13) target = $region8
    $region5: #{tpu_custom_call.1} parent=1 // loop_body
      %s17 = ssub.s32 %s12, 1
      %s18 = ssub.s32 %s12, 2
      %s19 = sadd.s32 %s12, 1
      %s20 = ssub.s32 %s12, %s19
      %p21 = scmp.eq.s32.totalorder %s20, 0
      %s23 = sadd.s32 %s22, 1
      %s24 = scalar_select %p21, %s22, %s23
      %p27 = pneg %p21
      %p28 = scmp.eq.s32.totalorder %s12, 1
      %p29 = por %p27, %p28
      %p30 = scmp.ne.s32.totalorder %s22, %s25
      %p31 = scmp.eq.s32.totalorder %s12, 0
      %p32 = por %p30, %p31
      %p33 = scmp.ne.s32.totalorder %s22, %s25
      %p34 = scmp.eq.s32.totalorder %s17, 1
      %p35 = por %p33, %p34
      %p36 = scmp.ne.s32.totalorder %s25, %s26
      %p37 = scmp.eq.s32.totalorder %s17, 0
      %p38 = por %p36, %p37
      %p39 = scmp.ne.s32.totalorder %s25, %s26
      %p40 = scmp.eq.s32.totalorder %s18, 1
      %p41 = por %p39, %p40
      %p43 = scmp.ne.s32.totalorder %s26, %s42
      %p44 = scmp.eq.s32.totalorder %s18, 0
      %p45 = por %p43, %p44
      %s47 = sadd.s32 %s46, 1
      %p50 = scmp.eq.s32.totalorder %s12, 1
      %p51 = scmp.ne.s32.totalorder %s46, %s48
      %p52 = scmp.eq.s32.totalorder %s12, 0
      %p53 = por %p51, %p52
      %p54 = scmp.ne.s32.totalorder %s46, %s48
      %p55 = scmp.eq.s32.totalorder %s17, 1
      %p56 = por %p54, %p55
      %p57 = scmp.ne.s32.totalorder %s48, %s49
      %p58 = scmp.eq.s32.totalorder %s17, 0
      %p59 = por %p57, %p58
      %p60 = scmp.ne.s32.totalorder %s48, %s49
      %p61 = scmp.eq.s32.totalorder %s18, 1
      %p62 = por %p60, %p61
      %p64 = scmp.ne.s32.totalorder %s49, %s63
      %p65 = scmp.eq.s32.totalorder %s18, 0
      %p66 = por %p64, %p65
      %s68 = sadd.s32 %s67, 1
      %p71 = scmp.eq.s32.totalorder %s12, 1
      %p72 = scmp.ne.s32.totalorder %s67, %s69
      %p73 = scmp.eq.s32.totalorder %s12, 0
      %p74 = por %p72, %p73
      %p75 = scmp.ne.s32.totalorder %s67, %s69
      %p76 = scmp.eq.s32.totalorder %s17, 1
      %p77 = por %p75, %p76
      %p78 = scmp.ne.s32.totalorder %s69, %s70
      %p79 = scmp.eq.s32.totalorder %s17, 0
      %p80 = por %p78, %p79
      %p81 = scmp.ne.s32.totalorder %s69, %s70
      %p82 = scmp.eq.s32.totalorder %s18, 1
      %p83 = por %p81, %p82
      %p85 = scmp.ne.s32.totalorder %s70, %s84
      %p86 = scmp.eq.s32.totalorder %s18, 0
      %p87 = por %p85, %p86
      %s88 = ssub.s32 %s12, %s19
      %p89 = scmp.eq.s32.totalorder %s88, 0
      %s91 = sadd.s32 %s90, 1
      %s92 = scalar_select %p89, %s90, %s91
      %p95 = pneg %p89
      %p96 = scmp.eq.s32.totalorder %s12, 1
      %p97 = por %p95, %p96
      %p98 = scmp.ne.s32.totalorder %s90, %s93
      %p99 = scmp.eq.s32.totalorder %s12, 0
      %p100 = por %p98, %p99
      %p101 = scmp.ne.s32.totalorder %s90, %s93
      %p102 = scmp.eq.s32.totalorder %s17, 1
      %p103 = por %p101, %p102
      %p104 = scmp.ne.s32.totalorder %s93, %s94
      %p105 = scmp.eq.s32.totalorder %s17, 0
      %p106 = por %p104, %p105
      %p107 = scmp.ne.s32.totalorder %s93, %s94
      %p108 = scmp.eq.s32.totalorder %s18, 1
      %p109 = por %p107, %p108
      %p111 = scmp.ne.s32.totalorder %s94, %s110
      %p112 = scmp.eq.s32.totalorder %s18, 0
      %p113 = por %p111, %p112
      %p114 = scmp.le.s32.totalorder 1, %s12
      %p115 = scmp.lt.s32.totalorder %s12, 3
      %p116 = pnand %p114, %p115
      %p117 = pneg %p116
      // Predicated region
      $region9: #{tpu_custom_call.1} parent=5 // pred_check
        _
      $region10: #{tpu_custom_call.1} parent=5 // pred_check_branch
        %119 = sbr.rel (%p116) target = $region12
      $region11: #{tpu_custom_call.1} parent=5 // pred_region
        %s120 = ssub.s32 %s12, 1
        // Predicated region
        $region13: #{tpu_custom_call.1} parent=11 // pred_check
          %p121 = pneg %p59
        $region14: #{tpu_custom_call.1} parent=11 // pred_check_branch
          %123 = sbr.rel (%p121) target = $region16
        $region15: #{tpu_custom_call.1} parent=11 // pred_region
          _
        $region16: #{tpu_custom_call.1} parent=11 // pred_fallthru
          _
        // Predicated region
        $region17: #{tpu_custom_call.1} parent=11 // pred_check
          %p124 = pneg %p80
        $region18: #{tpu_custom_call.1} parent=11 // pred_check_branch
          %126 = sbr.rel (%p124) target = $region20
        $region19: #{tpu_custom_call.1} parent=11 // pred_region
          _
        $region20: #{tpu_custom_call.1} parent=11 // pred_fallthru
          _
      $region12: #{tpu_custom_call.1} parent=5 // pred_fallthru
        _
      %p127 = scmp.lt.s32.totalorder %s12, 2
      // Predicated region
      $region21: #{tpu_custom_call.1} parent=5 // pred_check
        %p128 = pneg %p127
      $region22: #{tpu_custom_call.1} parent=5 // pred_check_branch
        %130 = sbr.rel (%p128) target = $region24
      $region23: #{tpu_custom_call.1} parent=5 // pred_region
        // Predicated region
        $region25: #{tpu_custom_call.1} parent=23 // pred_check
          %p131 = pneg %p32
        $region26: #{tpu_custom_call.1} parent=23 // pred_check_branch
          %133 = sbr.rel (%p131) target = $region28
        $region27: #{tpu_custom_call.1} parent=23 // pred_region
          %s134 = smul.u32 2, %s12
          %p135 = scmp.lt.s32.totalorder %s134, 3
          %s136 = scalar_select %p135, %s134, 3
          %s137 = smul.addr %s136, 4
          %s138 = scalar_lea.vmem %s0, %s137
          %s139 = smul.u32 2, %s12
        $region28: #{tpu_custom_call.1} parent=23 // pred_fallthru
          _
      $region24: #{tpu_custom_call.1} parent=5 // pred_fallthru
        _
      %p140 = scmp.le.s32.totalorder 1, %s12
      %p141 = scmp.lt.s32.totalorder %s12, 3
      %p142 = pnand %p140, %p141
      %p143 = pneg %p142
      // Predicated region
      $region29: #{tpu_custom_call.1} parent=5 // pred_check
        _
      $region30: #{tpu_custom_call.1} parent=5 // pred_check_branch
        %145 = sbr.rel (%p142) target = $region32
      $region31: #{tpu_custom_call.1} parent=5 // pred_region
        %s146 = ssub.s32 %s12, 1
        %s147 = smul.u32 2, %s17
        %p148 = scmp.lt.s32.totalorder %s147, 3
        %s149 = scalar_select %p148, %s147, 3
        %s150 = smul.addr %s149, 4
        %s151 = scalar_lea.vmem %s0, %s150
        %p152 = pneg %p38
        %p153 = pneg %p35
        %p154 = pneg %p59
        %p155 = pneg %p56
        %p156 = pneg %p80
        %p157 = pneg %p77
        %p158 = pneg %p106
        %p159 = pneg %p103
        %s160 = sand.u32 %s93, 1
        %s161 = scalar_lea.sflag [#allocation3], %s160
        %s162 = sand.u32 %s93, 1
        %s163 = smul.addr %s162, 8
        %s164 = scalar_lea.vmem [#allocation2], %s163
        %s165 = smul.u32 2, %s17
        %p166 = scmp.lt.s32.totalorder %s165, 3
        %s167 = scalar_select %p166, %s165, 3
        %s168 = smul.addr %s167, 4
        %s169 = scalar_lea.vmem %s0, %s168
        %s170 = smul.u32 2, %s17
        %s171 = smul.u32 2, %s17
        %v173 = vld [vmem:[%s169] sm:$0xf]
        %v174 = vld [vmem:[%s169 + $0x4] sm:$0xf]
        %v175 = vld [vmem:[%s1] sm:$0xf]
        %v176 = vld [vmem:[%s1 + $0x4] sm:$0xf]
        %v177 = vld [vmem:[%s1 + $0x8] sm:$0xf]
        %v178 = vld [vmem:[%s1 + $0xc] sm:$0xf]
        %v179 = vld [vmem:[%s1 + $0x10] sm:$0xf]
        %v180 = vld [vmem:[%s1 + $0x14] sm:$0xf]
        %v181 = vld [vmem:[%s1 + $0x18] sm:$0xf]
        %v182 = vld [vmem:[%s1 + $0x1c] sm:$0xf]
        %v183 = vld [vmem:[%s2] sm:$0x1]
        %v185 = vlaneseq
        %v186 = vshrl.u32 %v185, 7
        %v187 = vsub.s32 0, %v186
        %v188 = vrot.slane %v183, %v187
        %v192 = vunpack.c.l.b16 %v173
        %v193 = vunpack.c.l.b16 %v174
        %v194 = vpack.c.b16 %v193, %v192
        %v203 = vunpack.c.l.b16 %v175
        %v204 = vunpack.c.l.b16 %v176
        %v205 = vunpack.c.l.b16 %v177
        %v206 = vunpack.c.l.b16 %v178
        %v207 = vunpack.c.l.b16 %v179
        %v208 = vunpack.c.l.b16 %v180
        %v209 = vunpack.c.l.b16 %v181
        %v210 = vunpack.c.l.b16 %v182
        %v211 = vpack.c.b16 %v204, %v203
        %v212 = vpack.c.b16 %v206, %v205
        %v213 = vpack.c.b16 %v208, %v207
        %v214 = vpack.c.b16 %v210, %v209
        %vm219 = vcmask 523264
        %v221 = vsel %vm219, %v194, 0
        %223 = vmatprep.subr.bf16.mxu0 0
        %224 = vmatpush1.bf16.msra.mxu0 %v211
        %225 = vmatprep.subr.bf16.mxu0 0
        %226 = vmatpush1.bf16.msra.mxu0 %v212
        %227 = vmatprep.subr.bf16.mxu0 0
        %228 = vmatpush1.bf16.msra.mxu0 %v213
        %229 = vmatprep.subr.bf16.mxu0 0
        %230 = vmatpush1.bf16.msra.mxu0 %v214
        %231 = vmatprep.subr.bf16.mxu0 0
        %232 = vmatpush1.bf16.msra.mxu0 0
        %233 = vmatprep.subr.bf16.mxu0 0
        %234 = vmatpush1.bf16.msra.mxu0 0
        %235 = vmatprep.subr.bf16.mxu0 0
        %236 = vmatpush1.bf16.msra.mxu0 0
        %237 = vmatprep.subr.bf16.mxu0 0
        %238 = vmatpush1.bf16.msra.mxu0 0
        %239 = vmatprep.subr.bf16.mxu0 0
        %240 = vmatpush1.bf16.msra.mxu0 0
        %241 = vmatprep.subr.bf16.mxu0 0
        %242 = vmatpush1.bf16.msra.mxu0 0
        %243 = vmatprep.subr.bf16.mxu0 0
        %244 = vmatpush1.bf16.msra.mxu0 0
        %245 = vmatprep.subr.bf16.mxu0 0
        %246 = vmatpush1.bf16.msra.mxu0 0
        %247 = vmatprep.subr.bf16.mxu0 0
        %248 = vmatpush1.bf16.msra.mxu0 0
        %249 = vmatprep.subr.bf16.mxu0 0
        %250 = vmatpush1.bf16.msra.mxu0 0
        %251 = vmatprep.subr.bf16.mxu0 0
        %252 = vmatpush1.bf16.msra.mxu0 0
        %253 = vmatprep.subr.bf16.mxu0 0
        %254 = vmatpush1.bf16.msra.mxu0 0
        %255 = vmatprep.mubr.bf16.mxu0 0
        %256 = vmatmul.mubr.bf16.gmra.mrb[0].mxu0 %v221
        %v257 = vpop.f32.mrb[0].mxu0
        %v258 = vadd.f32 %v188, %v257
        %v259 = vpop.f32.mrb[0].mxu0
        %v260 = vpop.f32.mrb[0].mxu0
        %v261 = vadd.f32 %v188, %v260
        %v262 = vpop.f32.mrb[0].mxu0
        %263 = vdwg.mxu0
        %v264 = vpack.c.bf16 %v261, %v258
        %v266 = vunpack.c.l.b16 %v264
        %v267 = vunpack.c.h.b16 %v264
        %v268 = vpack.c.b16 %v266, %v266
        %v269 = vpack.c.b16 %v267, %v267
        %vm272 = vcmask 257024
        %273 = vst.msk [vmem:[%s164] sm:$0xf] %vm272, %v268
        %274 = vst.msk [vmem:[%s164 + $0x4] sm:$0xf] %vm272, %v269
        %s275 = sand.u32 %s93, 1
        %s276 = scalar_lea.sflag [#allocation3], %s275
        %s277 = sand.u32 %s93, 1
        %s278 = smul.addr %s277, 8
        %s279 = scalar_lea.vmem [#allocation2], %s278
        // Predicated region
        $region33: #{tpu_custom_call.1} parent=31 // pred_check
          %p280 = pneg %p103
        $region34: #{tpu_custom_call.1} parent=31 // pred_check_branch
          %282 = sbr.rel (%p280) target = $region36
        $region35: #{tpu_custom_call.1} parent=31 // pred_region
          %s283 = smul.u32 2, %s17
          %s285 = ssub.s32 128, 128
          %286 = vsyncadd %s276, %s285
          %s287 = smul.addr %s283, 64
          %s288 = scalar_lea.hbm %s3, %s287
          %s289 = sshll.u32 %s279, 4
          %s290 = int_to_ptr.vmem [resolvable:$true] %s289
          %295 = dma.vmem_to_hbm [thread:$0]  %s290, 128, %s288, %s276, 64, 64, 4
        $region36: #{tpu_custom_call.1} parent=31 // pred_fallthru
          _
      $region32: #{tpu_custom_call.1} parent=5 // pred_fallthru
        _
      %p296 = scmp.le.s32.totalorder 2, %s12
      // Predicated region
      $region37: #{tpu_custom_call.1} parent=5 // pred_check
        %p297 = pneg %p296
      $region38: #{tpu_custom_call.1} parent=5 // pred_check_branch
        %299 = sbr.rel (%p297) target = $region40
      $region39: #{tpu_custom_call.1} parent=5 // pred_region
        %s300 = ssub.s32 %s12, 2
        // Predicated region
        $region41: #{tpu_custom_call.1} parent=39 // pred_check
          %p301 = pneg %p109
        $region42: #{tpu_custom_call.1} parent=39 // pred_check_branch
          %303 = sbr.rel (%p301) target = $region44
        $region43: #{tpu_custom_call.1} parent=39 // pred_region
          %s304 = sand.u32 %s94, 1
          %s305 = scalar_lea.sflag [#allocation3], %s304
          %s306 = sand.u32 %s94, 1
          %s307 = smul.addr %s306, 8
          %s308 = scalar_lea.vmem [#allocation2], %s307
          %309 = dma.done %s305, 128
        $region44: #{tpu_custom_call.1} parent=39 // pred_fallthru
          _
      $region40: #{tpu_custom_call.1} parent=5 // pred_fallthru
        _
    $region6: #{tpu_custom_call.1} parent=1 // loop_footer
      %s16 = sadd.s32 1, %s12
    $region7: #{tpu_custom_call.1} parent=1 // loop_footer_branch
      %11 = sbr.rel target = $region3
    $region8: #{tpu_custom_call.1} parent=1 // loop_exit
      _
    %310 = vsyncpa [#allocation3], 1
    %s311 = scalar_lea.sflag [#allocation3], 1
    %312 = vsyncpa %s311, 1

// kernel: tpu_custom_call.1
$region0: #{tpu_custom_call.1}
  #allocation0 [shape = 'u32[]', space=smem, size = 0x4, offset = 0x4, fixed_abs, tag = 'smem constant byte address 0x4 - core index']
  #allocation1 [shape = 'u32[144,128]{1,0:T(1,128)}', space=vmem, size = 0x12000, scoped, tag = 'internal scratch']
  %s0 = inlined_call_operand.vmem [shape: bf16[32,64], index: 0, kind: input, shape index: {}]
  %s1 = inlined_call_operand.vmem [shape: bf16[64,32], index: 1, kind: input, shape index: {}]
  %s2 = inlined_call_operand.vmem [shape: f32[1,32], index: 2, kind: input, shape index: {}]
  %s3 = inlined_call_operand.hbm [shape: bf16[32,32], index: 3, kind: output, shape index: {}]
  %s4 = sld [smem:[#allocation0]]
  $region45: #{tpu_custom_call.1} parent=0
    _
  %s6 = ssub.s32 1, %s4
  %s7 = scalar_select 0, %s6, %s4
  $region1: #{tpu_custom_call.1} parent=0
    #allocation2 [shape = 'u8[8192]{0}', space=vmem, size = 0x2000, scoped, tag = 'output window, operand 0']
    #allocation3 [shape = 's32[2]{0}', space=sflag, size = 0x8, scoped, tag = 'scoped memory for tpu_custom_call.1']
    %8 = vsyncpa [#allocation3], 0
    %s9 = scalar_lea.sflag [#allocation3], 1
    %10 = vsyncpa %s9, 0
    loop: start=0, step=1, limit=4
    $region2: #{tpu_custom_call.1} parent=1 // loop_pre_header
      _
    $region3: #{tpu_custom_call.1} parent=1 // loop_header
      %s12 = sphi 0, %s16
      %p13 = scmp.ge.s32.totalorder %s12, 4
      %s22 = sphi 0, %s24
      %s25 = sphi 0, %s22
      %s26 = sphi 0, %s25
      %s42 = sphi 0, %s26
      %s46 = sphi 0, %s46
      %s48 = sphi 0, %s46
      %s49 = sphi 0, %s48
      %s63 = sphi 0, %s49
      %s67 = sphi 0, %s67
      %s69 = sphi 0, %s67
      %s70 = sphi 0, %s69
      %s84 = sphi 0, %s70
      %s90 = sphi 0, %s92
      %s93 = sphi 0, %s90
      %s94 = sphi 0, %s93
      %s110 = sphi 0, %s94
    $region4: #{tpu_custom_call.1} parent=1 // loop_header_branch
      %15 = sbr.rel (%p13) target = $region8
    $region5: #{tpu_custom_call.1} parent=1 // loop_body
      %s17 = ssub.s32 %s12, 1
      %s18 = ssub.s32 %s12, 2
      %s19 = sadd.s32 %s12, 1
      %s20 = ssub.s32 %s12, %s19
      %p21 = scmp.eq.s32.totalorder %s20, 0
      %s23 = sadd.s32 %s22, 1
      %s24 = scalar_select %p21, %s22, %s23
      %p27 = pneg %p21
      %p28 = scmp.eq.s32.totalorder %s12, 1
      %p29 = por %p27, %p28
      %p30 = scmp.ne.s32.totalorder %s22, %s25
      %p31 = scmp.eq.s32.totalorder %s12, 0
      %p32 = por %p30, %p31
      %p33 = scmp.ne.s32.totalorder %s22, %s25
      %p34 = scmp.eq.s32.totalorder %s17, 1
      %p35 = por %p33, %p34
      %p36 = scmp.ne.s32.totalorder %s25, %s26
      %p37 = scmp.eq.s32.totalorder %s17, 0
      %p38 = por %p36, %p37
      %p39 = scmp.ne.s32.totalorder %s25, %s26
      %p40 = scmp.eq.s32.totalorder %s18, 1
      %p41 = por %p39, %p40
      %p43 = scmp.ne.s32.totalorder %s26, %s42
      %p44 = scmp.eq.s32.totalorder %s18, 0
      %p45 = por %p43, %p44
      %s47 = sadd.s32 %s46, 1
      %p50 = scmp.eq.s32.totalorder %s12, 1
      %p51 = scmp.ne.s32.totalorder %s46, %s48
      %p52 = scmp.eq.s32.totalorder %s12, 0
      %p53 = por %p51, %p52
      %p54 = scmp.ne.s32.totalorder %s46, %s48
      %p55 = scmp.eq.s32.totalorder %s17, 1
      %p56 = por %p54, %p55
      %p57 = scmp.ne.s32.totalorder %s48, %s49
      %p58 = scmp.eq.s32.totalorder %s17, 0
      %p59 = por %p57, %p58
      %p60 = scmp.ne.s32.totalorder %s48, %s49
      %p61 = scmp.eq.s32.totalorder %s18, 1
      %p62 = por %p60, %p61
      %p64 = scmp.ne.s32.totalorder %s49, %s63
      %p65 = scmp.eq.s32.totalorder %s18, 0
      %p66 = por %p64, %p65
      %s68 = sadd.s32 %s67, 1
      %p71 = scmp.eq.s32.totalorder %s12, 1
      %p72 = scmp.ne.s32.totalorder %s67, %s69
      %p73 = scmp.eq.s32.totalorder %s12, 0
      %p74 = por %p72, %p73
      %p75 = scmp.ne.s32.totalorder %s67, %s69
      %p76 = scmp.eq.s32.totalorder %s17, 1
      %p77 = por %p75, %p76
      %p78 = scmp.ne.s32.totalorder %s69, %s70
      %p79 = scmp.eq.s32.totalorder %s17, 0
      %p80 = por %p78, %p79
      %p81 = scmp.ne.s32.totalorder %s69, %s70
      %p82 = scmp.eq.s32.totalorder %s18, 1
      %p83 = por %p81, %p82
      %p85 = scmp.ne.s32.totalorder %s70, %s84
      %p86 = scmp.eq.s32.totalorder %s18, 0
      %p87 = por %p85, %p86
      %s88 = ssub.s32 %s12, %s19
      %p89 = scmp.eq.s32.totalorder %s88, 0
      %s91 = sadd.s32 %s90, 1
      %s92 = scalar_select %p89, %s90, %s91
      %p95 = pneg %p89
      %p96 = scmp.eq.s32.totalorder %s12, 1
      %p97 = por %p95, %p96
      %p98 = scmp.ne.s32.totalorder %s90, %s93
      %p99 = scmp.eq.s32.totalorder %s12, 0
      %p100 = por %p98, %p99
      %p101 = scmp.ne.s32.totalorder %s90, %s93
      %p102 = scmp.eq.s32.totalorder %s17, 1
      %p103 = por %p101, %p102
      %p104 = scmp.ne.s32.totalorder %s93, %s94
      %p105 = scmp.eq.s32.totalorder %s17, 0
      %p106 = por %p104, %p105
      %p107 = scmp.ne.s32.totalorder %s93, %s94
      %p108 = scmp.eq.s32.totalorder %s18, 1
      %p109 = por %p107, %p108
      %p111 = scmp.ne.s32.totalorder %s94, %s110
      %p112 = scmp.eq.s32.totalorder %s18, 0
      %p113 = por %p111, %p112
      %p114 = scmp.le.s32.totalorder 1, %s12
      %p115 = scmp.lt.s32.totalorder %s12, 3
      %p116 = pnand %p114, %p115
      %p117 = pneg %p116
      // Predicated region
      $region9: #{tpu_custom_call.1} parent=5 // pred_check
        _
      $region10: #{tpu_custom_call.1} parent=5 // pred_check_branch
        %119 = sbr.rel (%p116) target = $region12
      $region11: #{tpu_custom_call.1} parent=5 // pred_region
        %s120 = ssub.s32 %s12, 1
        // Predicated region
        $region13: #{tpu_custom_call.1} parent=11 // pred_check
          %p121 = pneg %p59
        $region14: #{tpu_custom_call.1} parent=11 // pred_check_branch
          %123 = sbr.rel (%p121) target = $region16
        $region15: #{tpu_custom_call.1} parent=11 // pred_region
          _
        $region16: #{tpu_custom_call.1} parent=11 // pred_fallthru
          _
        // Predicated region
        $region17: #{tpu_custom_call.1} parent=11 // pred_check
          %p124 = pneg %p80
        $region18: #{tpu_custom_call.1} parent=11 // pred_check_branch
          %126 = sbr.rel (%p124) target = $region20
        $region19: #{tpu_custom_call.1} parent=11 // pred_region
          _
        $region20: #{tpu_custom_call.1} parent=11 // pred_fallthru
          _
      $region12: #{tpu_custom_call.1} parent=5 // pred_fallthru
        _
      %p127 = scmp.lt.s32.totalorder %s12, 2
      // Predicated region
      $region21: #{tpu_custom_call.1} parent=5 // pred_check
        %p128 = pneg %p127
      $region22: #{tpu_custom_call.1} parent=5 // pred_check_branch
        %130 = sbr.rel (%p128) target = $region24
      $region23: #{tpu_custom_call.1} parent=5 // pred_region
        // Predicated region
        $region25: #{tpu_custom_call.1} parent=23 // pred_check
          %p131 = pneg %p32
        $region26: #{tpu_custom_call.1} parent=23 // pred_check_branch
          %133 = sbr.rel (%p131) target = $region28
        $region27: #{tpu_custom_call.1} parent=23 // pred_region
          %s134 = smul.u32 2, %s12
          %p135 = scmp.lt.s32.totalorder %s134, 3
          %s136 = scalar_select %p135, %s134, 3
          %s137 = smul.addr %s136, 4
          %s138 = scalar_lea.vmem %s0, %s137
          %s139 = smul.u32 2, %s12
        $region28: #{tpu_custom_call.1} parent=23 // pred_fallthru
          _
      $region24: #{tpu_custom_call.1} parent=5 // pred_fallthru
        _
      %p140 = scmp.le.s32.totalorder 1, %s12
      %p141 = scmp.lt.s32.totalorder %s12, 3
      %p142 = pnand %p140, %p141
      %p143 = pneg %p142
      // Predicated region
      $region29: #{tpu_custom_call.1} parent=5 // pred_check
        _
      $region30: #{tpu_custom_call.1} parent=5 // pred_check_branch
        %145 = sbr.rel (%p142) target = $region32
      $region31: #{tpu_custom_call.1} parent=5 // pred_region
        %s146 = ssub.s32 %s12, 1
        %s147 = smul.u32 2, %s17
        %p148 = scmp.lt.s32.totalorder %s147, 3
        %s149 = scalar_select %p148, %s147, 3
        %s150 = smul.addr %s149, 4
        %s151 = scalar_lea.vmem %s0, %s150
        %p152 = pneg %p38
        %p153 = pneg %p35
        %p154 = pneg %p59
        %p155 = pneg %p56
        %p156 = pneg %p80
        %p157 = pneg %p77
        %p158 = pneg %p106
        %p159 = pneg %p103
        %s160 = sand.u32 %s93, 1
        %s161 = scalar_lea.sflag [#allocation3], %s160
        %s162 = sand.u32 %s93, 1
        %s163 = smul.addr %s162, 8
        %s164 = scalar_lea.vmem [#allocation2], %s163
        %s165 = smul.u32 2, %s17
        %p166 = scmp.lt.s32.totalorder %s165, 3
        %s167 = scalar_select %p166, %s165, 3
        %s168 = smul.addr %s167, 4
        %s169 = scalar_lea.vmem %s0, %s168
        %s170 = smul.u32 2, %s17
        %s171 = smul.u32 2, %s17
        %v173 = vld [vmem:[%s169] sm:$0xf]
        %v174 = vld [vmem:[%s169 + $0x4] sm:$0xf]
        %v175 = vld [vmem:[%s1] sm:$0xf]
        %v176 = vld [vmem:[%s1 + $0x4] sm:$0xf]
        %v177 = vld [vmem:[%s1 + $0x8] sm:$0xf]
        %v178 = vld [vmem:[%s1 + $0xc] sm:$0xf]
        %v179 = vld [vmem:[%s1 + $0x10] sm:$0xf]
        %v180 = vld [vmem:[%s1 + $0x14] sm:$0xf]
        %v181 = vld [vmem:[%s1 + $0x18] sm:$0xf]
        %v182 = vld [vmem:[%s1 + $0x1c] sm:$0xf]
        %v183 = vld [vmem:[%s2] sm:$0x1]
        %v185 = vlaneseq
        %v186 = vshrl.u32 %v185, 7
        %v187 = vsub.s32 0, %v186
        %v188 = vrot.slane %v183, %v187
        %v192 = vunpack.c.l.b16 %v173
        %v193 = vunpack.c.l.b16 %v174
        %v194 = vpack.c.b16 %v193, %v192
        %v203 = vunpack.c.l.b16 %v175
        %v204 = vunpack.c.l.b16 %v176
        %v205 = vunpack.c.l.b16 %v177
        %v206 = vunpack.c.l.b16 %v178
        %v207 = vunpack.c.l.b16 %v179
        %v208 = vunpack.c.l.b16 %v180
        %v209 = vunpack.c.l.b16 %v181
        %v210 = vunpack.c.l.b16 %v182
        %v211 = vpack.c.b16 %v204, %v203
        %v212 = vpack.c.b16 %v206, %v205
        %v213 = vpack.c.b16 %v208, %v207
        %v214 = vpack.c.b16 %v210, %v209
        %vm219 = vcmask 523264
        %v221 = vsel %vm219, %v194, 0
        %223 = vmatprep.subr.bf16.mxu0 0
        %224 = vmatpush1.bf16.msra.mxu0 %v211
        %225 = vmatprep.subr.bf16.mxu0 0
        %226 = vmatpush1.bf16.msra.mxu0 %v212
        %227 = vmatprep.subr.bf16.mxu0 0
        %228 = vmatpush1.bf16.msra.mxu0 %v213
        %229 = vmatprep.subr.bf16.mxu0 0
        %230 = vmatpush1.bf16.msra.mxu0 %v214
        %231 = vmatprep.subr.bf16.mxu0 0
        %232 = vmatpush1.bf16.msra.mxu0 0
        %233 = vmatprep.subr.bf16.mxu0 0
        %234 = vmatpush1.bf16.msra.mxu0 0
        %235 = vmatprep.subr.bf16.mxu0 0
        %236 = vmatpush1.bf16.msra.mxu0 0
        %237 = vmatprep.subr.bf16.mxu0 0
        %238 = vmatpush1.bf16.msra.mxu0 0
        %239 = vmatprep.subr.bf16.mxu0 0
        %240 = vmatpush1.bf16.msra.mxu0 0
        %241 = vmatprep.subr.bf16.mxu0 0
        %242 = vmatpush1.bf16.msra.mxu0 0
        %243 = vmatprep.subr.bf16.mxu0 0
        %244 = vmatpush1.bf16.msra.mxu0 0
        %245 = vmatprep.subr.bf16.mxu0 0
        %246 = vmatpush1.bf16.msra.mxu0 0
        %247 = vmatprep.subr.bf16.mxu0 0
        %248 = vmatpush1.bf16.msra.mxu0 0
        %249 = vmatprep.subr.bf16.mxu0 0
        %250 = vmatpush1.bf16.msra.mxu0 0
        %251 = vmatprep.subr.bf16.mxu0 0
        %252 = vmatpush1.bf16.msra.mxu0 0
        %253 = vmatprep.subr.bf16.mxu0 0
        %254 = vmatpush1.bf16.msra.mxu0 0
        %255 = vmatprep.mubr.bf16.mxu0 0
        %256 = vmatmul.mubr.bf16.gmra.mrb[0].mxu0 %v221
        %v257 = vpop.f32.mrb[0].mxu0
        %v258 = vadd.f32 %v188, %v257
        %v259 = vpop.f32.mrb[0].mxu0
        %v260 = vpop.f32.mrb[0].mxu0
        %v261 = vadd.f32 %v188, %v260
        %v262 = vpop.f32.mrb[0].mxu0
        %263 = vdwg.mxu0
        %v264 = vpack.c.bf16 %v261, %v258
        %v266 = vunpack.c.l.b16 %v264
        %v267 = vunpack.c.h.b16 %v264
        %v268 = vpack.c.b16 %v266, %v266
        %v269 = vpack.c.b16 %v267, %v267
        %vm272 = vcmask 257024
        %273 = vst.msk [vmem:[%s164] sm:$0xf] %vm272, %v268
        %274 = vst.msk [vmem:[%s164 + $0x4] sm:$0xf] %vm272, %v269
        %s275 = sand.u32 %s93, 1
        %s276 = scalar_lea.sflag [#allocation3], %s275
        %s277 = sand.u32 %s93, 1
        %s278 = smul.addr %s277, 8
        %s279 = scalar_lea.vmem [#allocation2], %s278
        // Predicated region
        $region33: #{tpu_custom_call.1} parent=31 // pred_check
          %p280 = pneg %p103
        $region34: #{tpu_custom_call.1} parent=31 // pred_check_branch
          %282 = sbr.rel (%p280) target = $region36
        $region35: #{tpu_custom_call.1} parent=31 // pred_region
          %s283 = smul.u32 2, %s17
          %s285 = ssub.s32 128, 128
          %286 = vsyncadd %s276, %s285
          %s287 = smul.addr %s283, 64
          %s288 = scalar_lea.hbm %s3, %s287
          %s289 = sshll.u32 %s279, 4
          %s290 = int_to_ptr.vmem [resolvable:$true] %s289
          %295 = dma.vmem_to_hbm [thread:$0]  %s290, 128, %s288, %s276, 64, 64, 4
        $region36: #{tpu_custom_call.1} parent=31 // pred_fallthru
          _
      $region32: #{tpu_custom_call.1} parent=5 // pred_fallthru
        _
      %p296 = scmp.le.s32.totalorder 2, %s12
      // Predicated region
      $region37: #{tpu_custom_call.1} parent=5 // pred_check
        %p297 = pneg %p296
      $region38: #{tpu_custom_call.1} parent=5 // pred_check_branch
        %299 = sbr.rel (%p297) target = $region40
      $region39: #{tpu_custom_call.1} parent=5 // pred_region
        %s300 = ssub.s32 %s12, 2
        // Predicated region
        $region41: #{tpu_custom_call.1} parent=39 // pred_check
          %p301 = pneg %p109
        $region42: #{tpu_custom_call.1} parent=39 // pred_check_branch
          %303 = sbr.rel (%p301) target = $region44
        $region43: #{tpu_custom_call.1} parent=39 // pred_region
          %s304 = sand.u32 %s94, 1
          %s305 = scalar_lea.sflag [#allocation3], %s304
          %s306 = sand.u32 %s94, 1
          %s307 = smul.addr %s306, 8
          %s308 = scalar_lea.vmem [#allocation2], %s307
          %309 = dma.done %s305, 128
        $region44: #{tpu_custom_call.1} parent=39 // pred_fallthru
          _
      $region40: #{tpu_custom_call.1} parent=5 // pred_fallthru
        _
    $region6: #{tpu_custom_call.1} parent=1 // loop_footer
      %s16 = sadd.s32 1, %s12
    $region7: #{tpu_custom_call.1} parent=1 // loop_footer_branch
      %11 = sbr.rel target = $region3
    $region8: #{tpu_custom_call.1} parent=1 // loop_exit
      _
    %310 = vsyncpa [#allocation3], 1
    %s311 = scalar_lea.sflag [#allocation3], 1
    %312 = vsyncpa %s311, 1

</llo_original>
